<compile_context>
chip_gen: v7x
topology: tpu7x:2x2x1
jax: 0.10.0
libtpu: 0.0.40
codegen_flags: <defaults>
</compile_context>

<pallas_src>
import functools

import jax
import jax.numpy as jnp
from jax.experimental import pallas as pl
from jax.experimental.pallas import tpu as pltpu

ACTION_DISCRETE = 0
ACTION_CONTINUOUS = 1

_VMEM_LIMIT_BYTES = 32 * 1024 * 1024  # safe headroom on v5e/v6e/v7x


# ---------------------------------------------------------------------------
# Kernels (feature-major: tensors are (features, batch_tile))
# ---------------------------------------------------------------------------
def _discrete_kernel(x_ref, w1_ref, b1_ref, w2_ref, b2_ref, w3_ref, b3_ref,
                     out_ref):
    # x arrives f32; cast to bf16 on the VPU right before the MXU matmul
    # (keeps HBM input traffic f32-once instead of f32-read + bf16-write+read).
    x = x_ref[...].astype(w1_ref.dtype)                                  # (F, TB)
    h1 = jnp.tanh(jnp.dot(w1_ref[...], x,
                          preferred_element_type=jnp.float32) + b1_ref[...])
    h2 = jnp.tanh(jnp.dot(w2_ref[...], h1.astype(w2_ref.dtype),
                          preferred_element_type=jnp.float32) + b2_ref[...])
    logits = (jnp.dot(w3_ref[...], h2.astype(w3_ref.dtype),
                      preferred_element_type=jnp.float32) + b3_ref[...])  # (A, TB)
    # Per-sample softmax over the A sublane rows.  torch's global max-shift is a
    # softmax no-op; the per-column max keeps numerical stability.
    e = jnp.exp(logits - jnp.max(logits, axis=0, keepdims=True))
    # Exact division (not approx reciprocal) so each column sums to exactly ~1
    # for downstream np.random.choice-style sampling.
    out_ref[...] = e / jnp.sum(e, axis=0, keepdims=True)


def _continuous_kernel(x_ref, w1_ref, b1_ref, w23_ref, b23_ref, wp_ref, bp_ref,
                       scale_ref, out_ref, *, distribution):
    x = x_ref[...].astype(w1_ref.dtype)                                  # (F, TB)
    h = jnp.tanh(jnp.dot(w1_ref[...], x,
                         preferred_element_type=jnp.float32) + b1_ref[...])
    # Fused linear2 | linear3 (rows stacked): one (64 x 32) @ (32 x TB) matmul.
    h12 = jnp.tanh(jnp.dot(w23_ref[...], h.astype(w23_ref.dtype),
                           preferred_element_type=jnp.float32) + b23_ref[...])
    # Fused heads: blockdiag(wp1, wp2) @ [x1 ; x2] = [wp1@x1 ; wp2@x2].
    heads = (jnp.dot(wp_ref[...], h12.astype(wp_ref.dtype),
                     preferred_element_type=jnp.float32) + bp_ref[...])   # (2A, TB)
    if distribution == "normal":
        # scale = [1]*A rows | [0.5]*A rows, resident (2A, 1) vector.
        out_ref[...] = jax.nn.sigmoid(heads) * scale_ref[...]
    elif distribution == "beta":
        out_ref[...] = jax.nn.softplus(heads)
    else:
        raise AssertionError("unknown distribution")


# ---------------------------------------------------------------------------
# Wrappers
# ---------------------------------------------------------------------------
def _pick_batch_tile(batch, target=8192):
    """Lane-dim (batch) tile: full batch if small, else a multiple of 128 capped
    at `target` and at ~batch/2 so the 'parallel' grid has >=2 steps (keeps both
    v7x TensorCores busy)."""
    target = max(128, (target // 128) * 128)
    if batch < 256:
        return batch                                   # single full-dim tile
    half = (((batch + 1) // 2) + 127) // 128 * 128     # >=2 grid steps
    return min(target, half)


def _const_spec(shape):
    # Full-array block with constant index_map -> stays resident in VMEM across
    # the batch grid (weights/biases are not re-DMA'd per step).
    return pl.BlockSpec(shape, lambda i: tuple(0 for _ in shape))


def actor_forward_discrete(x, prep, *, batch_tile=8192):
    """Discrete head. x: (B, num_features) f32. Returns (B, A) softmax probs."""
    B, F = x.shape
    H = prep["w1"].shape[0]
    A = prep["w3"].shape[0]
    TB = _pick_batch_tile(B, batch_tile)
    grid = (pl.cdiv(B, TB),)
    out_t = pl.pallas_call(
        _discrete_kernel,
        grid=grid,
        out_shape=jax.ShapeDtypeStruct((A, B), jnp.float32),
        in_specs=[
            pl.BlockSpec((F, TB), lambda i: (0, i)),    # x streamed over batch
            _const_spec((H, F)), _const_spec((H, 1)),   # linear1
            _const_spec((H, H)), _const_spec((H, 1)),   # linear2
            _const_spec((A, H)), _const_spec((A, 1)),   # linear3
        ],
        out_specs=pl.BlockSpec((A, TB), lambda i: (0, i)),
        compiler_params=pltpu.CompilerParams(
            dimension_semantics=("parallel",),
            vmem_limit_bytes=_VMEM_LIMIT_BYTES),
        cost_estimate=pl.CostEstimate(
            flops=2 * B * (F * H + H * H + H * A),
            transcendentals=B * (2 * H + A),
            bytes_accessed=4 * B * (F + A) + 2 * (F * H + H * H + H * A)),
    )(x.T, prep["w1"], prep["b1"], prep["w2"], prep["b2"],
      prep["w3"], prep["b3"])
    return out_t.T


def actor_forward_continuous(x, prep, distribution, *, batch_tile=8192):
    """Continuous heads. Returns (param1, param2), each (B, A)."""
    B, F = x.shape
    A = prep["num_actions"]
    H = prep["w1"].shape[0]        # 32
    H2 = prep["w23"].shape[0]      # 64
    TB = _pick_batch_tile(B, batch_tile)
    grid = (pl.cdiv(B, TB),)
    kern = functools.partial(_continuous_kernel, distribution=distribution)
    out_t = pl.pallas_call(
        kern,
        grid=grid,
        out_shape=jax.ShapeDtypeStruct((2 * A, B), jnp.float32),
        in_specs=[
            pl.BlockSpec((F, TB), lambda i: (0, i)),            # x streamed
            _const_spec((H, F)), _const_spec((H, 1)),           # linear1
            _const_spec((H2, H)), _const_spec((H2, 1)),         # fused l2|l3
            _const_spec((2 * A, H2)), _const_spec((2 * A, 1)),  # fused heads
            _const_spec((2 * A, 1)),                            # normal-scale
        ],
        out_specs=pl.BlockSpec((2 * A, TB), lambda i: (0, i)),
        compiler_params=pltpu.CompilerParams(
            dimension_semantics=("parallel",),
            vmem_limit_bytes=_VMEM_LIMIT_BYTES),
        cost_estimate=pl.CostEstimate(
            flops=2 * B * (F * H + H * H2 + H2 * 2 * A),
            transcendentals=B * (H + H2 + 2 * A),
            bytes_accessed=4 * B * (F + 2 * A)
                           + 2 * (F * H + H * H2 + H2 * 2 * A)),
    )(x.T, prep["w1"], prep["b1"], prep["w23"], prep["b23"],
      prep["wp"], prep["bp"], prep["scale"])
    return out_t[:A].T, out_t[A:].T


# ---------------------------------------------------------------------------
# Parameter init (torch.nn.Linear layout: weight (out, in), bias (out,);
# U(-1/sqrt(in), 1/sqrt(in))) + one-time prep (bf16 matmul weights, fused
# continuous-branch weights, resident head-scale vector).
# ---------------------------------------------------------------------------
def _linear_params(key, fan_in, fan_out):
    kw, kb = jax.random.split(key)
    bound = 1.0 / jnp.sqrt(jnp.float32(fan_in))
    w = jax.random.uniform(kw, (fan_out, fan_in), jnp.float32, -bound, bound)
    b = jax.random.uniform(kb, (fan_out, 1), jnp.float32, -bound, bound)
    return w, b


def make_actor_params(key, num_features, num_actions, action_type):
    keys = jax.random.split(key, 5)
    p = {}
    p["w1"], p["b1"] = _linear_params(keys[0], num_features, 32)
    p["w2"], p["b2"] = _linear_params(keys[1], 32, 32)
    if action_type == ACTION_DISCRETE:
        p["w3"], p["b3"] = _linear_params(keys[2], 32, num_actions)
    else:
        p["w3"], p["b3"] = _linear_params(keys[2], 32, 32)
        p["wp1"], p["bp1"] = _linear_params(keys[3], 32, num_actions)
        p["wp2"], p["bp2"] = _linear_params(keys[4], 32, num_actions)
    return p


def prepare_discrete_params(p):
    """One-time prep: bf16 weights for the MXU, f32 biases (out, 1)."""
    return {"w1": p["w1"].astype(jnp.bfloat16), "b1": p["b1"],
            "w2": p["w2"].astype(jnp.bfloat16), "b2": p["b2"],
            "w3": p["w3"].astype(jnp.bfloat16), "b3": p["b3"]}


def prepare_continuous_params(p):
    """One-time prep: fuse linear2|linear3 (row-stacked), block-diagonalize the
    two heads, and build the (2A, 1) normal-distribution scale vector."""
    A = p["wp1"].shape[0]
    H = p["w2"].shape[0]                                           # 32
    w23 = jnp.concatenate([p["w2"], p["w3"]], axis=0)              # (64, 32)
    b23 = jnp.concatenate([p["b2"], p["b3"]], axis=0)              # (64, 1)
    wp = jnp.zeros((2 * A, 2 * H), jnp.float32)
    wp = wp.at[:A, :H].set(p["wp1"]).at[A:, H:].set(p["wp2"])      # block diag
    bp = jnp.concatenate([p["bp1"], p["bp2"]], axis=0)             # (2A, 1)
    scale = jnp.concatenate([jnp.ones((A, 1), jnp.float32),
                             jnp.full((A, 1), 0.5, jnp.float32)], axis=0)
    return {"w1": p["w1"].astype(jnp.bfloat16), "b1": p["b1"],
            "w23": w23.astype(jnp.bfloat16), "b23": b23,
            "wp": wp.astype(jnp.bfloat16), "bp": bp,
            "scale": scale, "num_actions": A}


# ---------------------------------------------------------------------------
# Pure-JAX references (same bf16-weight / f32-accumulate scheme, unfused graph,
# standard batch-major layout)
# ---------------------------------------------------------------------------
def _ref_discrete(x, prep):
    xb = x.astype(jnp.bfloat16)
    h1 = jnp.tanh(jnp.dot(xb, prep["w1"].T,
                          preferred_element_type=jnp.float32) + prep["b1"].T)
    h2 = jnp.tanh(jnp.dot(h1.astype(jnp.bfloat16), prep["w2"].T,
                          preferred_element_type=jnp.float32) + prep["b2"].T)
    logits = (jnp.dot(h2.astype(jnp.bfloat16), prep["w3"].T,
                      preferred_element_type=jnp.float32) + prep["b3"].T)
    logits = logits - jnp.max(logits)           # torch's global shift (no-op)
    return jax.nn.softmax(logits, axis=-1)


def _ref_continuous(x, p, distribution):
    cast = lambda a: a.astype(jnp.bfloat16)
    xb = cast(x)
    h = jnp.tanh(jnp.dot(xb, cast(p["w1"]).T,
                         preferred_element_type=jnp.float32) + p["b1"].T)
    hb = cast(h)
    x1 = jnp.tanh(jnp.dot(hb, cast(p["w2"]).T,
                          preferred_element_type=jnp.float32) + p["b2"].T)
    x2 = jnp.tanh(jnp.dot(hb, cast(p["w3"]).T,
                          preferred_element_type=jnp.float32) + p["b3"].T)
    x1 = jnp.dot(cast(x1), cast(p["wp1"]).T,
                 preferred_element_type=jnp.float32) + p["bp1"].T
    x2 = jnp.dot(cast(x2), cast(p["wp2"]).T,
                 preferred_element_type=jnp.float32) + p["bp2"].T
    if distribution == "normal":
        return jax.nn.sigmoid(x1), jax.nn.sigmoid(x2) / 2.0
    return jax.nn.softplus(x1), jax.nn.softplus(x2)


# ---------------------------------------------------------------------------
if __name__ == "__main__":
    F, A = 8, 4
    key = jax.random.PRNGKey(0)
    kx_small, kx_big, kd, kc = jax.random.split(key, 4)

    raw_d = make_actor_params(kd, F, A, ACTION_DISCRETE)
    prep_d = prepare_discrete_params(raw_d)
    raw_c = make_actor_params(kc, F, A, ACTION_CONTINUOUS)
    prep_c = prepare_continuous_params(raw_c)

    # B=2: tiny single-tile case; B=384: multi-tile (grid=2, padded last tile).
    for B, kk in ((2, kx_small), (384, kx_big)):
        x = jax.random.normal(kk, (B, F), jnp.float32)

        # --- discrete actor ---
        probs = jax.block_until_ready(actor_forward_discrete(x, prep_d))
        assert probs.shape == (B, A)
        assert jnp.allclose(probs, _ref_discrete(x, prep_d), atol=2e-3, rtol=2e-3)
        assert jnp.allclose(jnp.sum(probs, axis=-1), 1.0, atol=1e-5)

        # --- continuous actor, normal distribution ---
        p1n, p2n = jax.block_until_ready(
            actor_forward_continuous(x, prep_c, "normal"))
        r1n, r2n = _ref_continuous(x, raw_c, "normal")
        assert p1n.shape == (B, A) and p2n.shape == (B, A)
        assert jnp.allclose(p1n, r1n, atol=2e-3, rtol=2e-3)
        assert jnp.allclose(p2n, r2n, atol=2e-3, rtol=2e-3)

        # --- continuous actor, beta distribution ---
        p1b, p2b = jax.block_until_ready(
            actor_forward_continuous(x, prep_c, "beta"))
        r1b, r2b = _ref_continuous(x, raw_c, "beta")
        assert jnp.allclose(p1b, r1b, atol=2e-3, rtol=2e-3)
        assert jnp.allclose(p2b, r2b, atol=2e-3, rtol=2e-3)

    # TODO(synk): get_distribution / select_action (Normal/Beta sampling and
    # np.random.choice) is host-side sampling logic, not kernel compute; omitted.
    print("KERNEL_OK")
</pallas_src>

<mosaic_0001>
module attributes {stable_mosaic.version = 11 : i64} {
  func.func @_discrete_kernel(%arg0: i32, %arg1: memref<8x2xf32, #tpu.memory_space<vmem>>, %arg2: memref<32x8xbf16, #tpu.memory_space<vmem>>, %arg3: memref<32x1xf32, #tpu.memory_space<vmem>>, %arg4: memref<32x32xbf16, #tpu.memory_space<vmem>>, %arg5: memref<32x1xf32, #tpu.memory_space<vmem>>, %arg6: memref<4x32xbf16, #tpu.memory_space<vmem>>, %arg7: memref<4x1xf32, #tpu.memory_space<vmem>>, %arg8: memref<4x2xf32, #tpu.memory_space<vmem>>) attributes {dimension_semantics = [#tpu.dimension_semantics<parallel>], iteration_bounds = array<i64: 1>, scalar_prefetch = 0 : i64, scratch_operands = 0 : i64, tpu.core_type = #tpu.core_type<tc>, window_params = [{transform_indices = @transform_0, window_bounds = array<i64: 8, 2>}, {pipeline_mode = #tpu.pipeline_mode<synchronous>, transform_indices = @transform_1, window_bounds = array<i64: 32, 8>}, {pipeline_mode = #tpu.pipeline_mode<synchronous>, transform_indices = @transform_2, window_bounds = array<i64: 32, 1>}, {pipeline_mode = #tpu.pipeline_mode<synchronous>, transform_indices = @transform_3, window_bounds = array<i64: 32, 32>}, {pipeline_mode = #tpu.pipeline_mode<synchronous>, transform_indices = @transform_4, window_bounds = array<i64: 32, 1>}, {pipeline_mode = #tpu.pipeline_mode<synchronous>, transform_indices = @transform_5, window_bounds = array<i64: 4, 32>}, {pipeline_mode = #tpu.pipeline_mode<synchronous>, transform_indices = @transform_6, window_bounds = array<i64: 4, 1>}, {transform_indices = @transform_7, window_bounds = array<i64: 4, 2>}]} {
    %c0 = arith.constant 0 : index
    %c0_0 = arith.constant 0 : index
    %0 = vector.load %arg1[%c0, %c0_0] : memref<8x2xf32, #tpu.memory_space<vmem>>, vector<8x2xf32>
    %1 = arith.truncf %0 : vector<8x2xf32> to vector<8x2xbf16>
    %c0_1 = arith.constant 0 : index
    %c0_2 = arith.constant 0 : index
    %2 = vector.load %arg2[%c0_1, %c0_2] : memref<32x8xbf16, #tpu.memory_space<vmem>>, vector<32x8xbf16>
    %cst = arith.constant dense<0.000000e+00> : vector<32x2xf32>
    %3 = tpu.matmul %2, %1, %cst {dimension_numbers = #tpu.dot_dimension_numbers<[1], [0], [0], [1], [0, 0, 1, 1], [], []>} : vector<32x8xbf16>, vector<8x2xbf16>, vector<32x2xf32> -> vector<32x2xf32>
    %c0_3 = arith.constant 0 : index
    %c0_4 = arith.constant 0 : index
    %4 = vector.load %arg3[%c0_3, %c0_4] : memref<32x1xf32, #tpu.memory_space<vmem>>, vector<32x1xf32>
    %5 = vector.broadcast %4 : vector<32x1xf32> to vector<32x2xf32>
    %6 = arith.addf %3, %5 : vector<32x2xf32>
    %7 = math.tanh %6 : vector<32x2xf32>
    %c0_5 = arith.constant 0 : index
    %c0_6 = arith.constant 0 : index
    %8 = vector.load %arg4[%c0_5, %c0_6] : memref<32x32xbf16, #tpu.memory_space<vmem>>, vector<32x32xbf16>
    %9 = arith.truncf %7 : vector<32x2xf32> to vector<32x2xbf16>
    %cst_7 = arith.constant dense<0.000000e+00> : vector<32x2xf32>
    %10 = tpu.matmul %8, %9, %cst_7 {dimension_numbers = #tpu.dot_dimension_numbers<[1], [0], [0], [1], [0, 0, 1, 1], [], []>} : vector<32x32xbf16>, vector<32x2xbf16>, vector<32x2xf32> -> vector<32x2xf32>
    %c0_8 = arith.constant 0 : index
    %c0_9 = arith.constant 0 : index
    %11 = vector.load %arg5[%c0_8, %c0_9] : memref<32x1xf32, #tpu.memory_space<vmem>>, vector<32x1xf32>
    %12 = vector.broadcast %11 : vector<32x1xf32> to vector<32x2xf32>
    %13 = arith.addf %10, %12 : vector<32x2xf32>
    %14 = math.tanh %13 : vector<32x2xf32>
    %c0_10 = arith.constant 0 : index
    %c0_11 = arith.constant 0 : index
    %15 = vector.load %arg6[%c0_10, %c0_11] : memref<4x32xbf16, #tpu.memory_space<vmem>>, vector<4x32xbf16>
    %16 = arith.truncf %14 : vector<32x2xf32> to vector<32x2xbf16>
    %cst_12 = arith.constant dense<0.000000e+00> : vector<4x2xf32>
    %17 = tpu.matmul %15, %16, %cst_12 {dimension_numbers = #tpu.dot_dimension_numbers<[1], [0], [0], [1], [0, 0, 1, 1], [], []>} : vector<4x32xbf16>, vector<32x2xbf16>, vector<4x2xf32> -> vector<4x2xf32>
    %c0_13 = arith.constant 0 : index
    %c0_14 = arith.constant 0 : index
    %18 = vector.load %arg7[%c0_13, %c0_14] : memref<4x1xf32, #tpu.memory_space<vmem>>, vector<4x1xf32>
    %19 = vector.broadcast %18 : vector<4x1xf32> to vector<4x2xf32>
    %20 = arith.addf %17, %19 : vector<4x2xf32>
    %cst_15 = arith.constant dense<0xFF800000> : vector<2xf32>
    %21 = vector.multi_reduction <maximumf>, %20, %cst_15 [0] : vector<4x2xf32> to vector<2xf32>
    %22 = vector.shape_cast %21 : vector<2xf32> to vector<1x2xf32>
    %23 = vector.broadcast %22 : vector<1x2xf32> to vector<4x2xf32>
    %24 = arith.subf %20, %23 : vector<4x2xf32>
    %25 = math.exp %24 : vector<4x2xf32>
    %cst_16 = arith.constant dense<0.000000e+00> : vector<2xf32>
    %26 = vector.multi_reduction <add>, %25, %cst_16 [0] : vector<4x2xf32> to vector<2xf32>
    %27 = vector.shape_cast %26 : vector<2xf32> to vector<1x2xf32>
    %28 = vector.broadcast %27 : vector<1x2xf32> to vector<4x2xf32>
    %29 = arith.divf %25, %28 : vector<4x2xf32>
    %c0_17 = arith.constant 0 : index
    %c0_18 = arith.constant 0 : index
    %30 = vector.load %arg8[%c0_17, %c0_18] : memref<4x2xf32, #tpu.memory_space<vmem>>, vector<4x2xf32>
    tpu.vector_store %arg8[%c0_17, %c0_18], %29 {strides = array<i32>} : memref<4x2xf32, #tpu.memory_space<vmem>>, vector<4x2xf32>,
    return
  }
  func.func @transform_0(%arg0: i32) -> (i32, i32) {
    %c0_i32 = arith.constant 0 : i32
    %c0_i32_0 = arith.constant 0 : i32
    return %c0_i32, %arg0 : i32, i32
  }
  func.func @transform_1(%arg0: i32) -> (i32, i32) {
    %c0_i32 = arith.constant 0 : i32
    %c0_i32_0 = arith.constant 0 : i32
    %c0_i32_1 = arith.constant 0 : i32
    return %c0_i32, %c0_i32_0 : i32, i32
  }
  func.func @transform_2(%arg0: i32) -> (i32, i32) {
    %c0_i32 = arith.constant 0 : i32
    %c0_i32_0 = arith.constant 0 : i32
    %c0_i32_1 = arith.constant 0 : i32
    return %c0_i32, %c0_i32_0 : i32, i32
  }
  func.func @transform_3(%arg0: i32) -> (i32, i32) {
    %c0_i32 = arith.constant 0 : i32
    %c0_i32_0 = arith.constant 0 : i32
    %c0_i32_1 = arith.constant 0 : i32
    return %c0_i32, %c0_i32_0 : i32, i32
  }
  func.func @transform_4(%arg0: i32) -> (i32, i32) {
    %c0_i32 = arith.constant 0 : i32
    %c0_i32_0 = arith.constant 0 : i32
    %c0_i32_1 = arith.constant 0 : i32
    return %c0_i32, %c0_i32_0 : i32, i32
  }
  func.func @transform_5(%arg0: i32) -> (i32, i32) {
    %c0_i32 = arith.constant 0 : i32
    %c0_i32_0 = arith.constant 0 : i32
    %c0_i32_1 = arith.constant 0 : i32
    return %c0_i32, %c0_i32_0 : i32, i32
  }
  func.func @transform_6(%arg0: i32) -> (i32, i32) {
    %c0_i32 = arith.constant 0 : i32
    %c0_i32_0 = arith.constant 0 : i32
    %c0_i32_1 = arith.constant 0 : i32
    return %c0_i32, %c0_i32_0 : i32, i32
  }
  func.func @transform_7(%arg0: i32) -> (i32, i32) {
    %c0_i32 = arith.constant 0 : i32
    %c0_i32_0 = arith.constant 0 : i32
    return %c0_i32, %arg0 : i32, i32
  }
}

</mosaic_0001>

<llo_original>
// kernel: tpu_custom_call.1
$region0: #{tpu_custom_call.1}
  #allocation0 [shape = 'u32[]', space=smem, size = 0x4, offset = 0x4, fixed_abs, tag = 'smem constant byte address 0x4 - core index']
  #allocation1 [shape = 'u32[144,128]{1,0:T(1,128)}', space=vmem, size = 0x12000, scoped, tag = 'internal scratch']
  %s0 = inlined_call_operand.vmem [shape: f32[8,2], index: 0, kind: input, shape index: {}]
  %s1 = inlined_call_operand.vmem [shape: bf16[32,8], index: 1, kind: input, shape index: {}]
  %s2 = inlined_call_operand.vmem [shape: f32[32,1], index: 2, kind: input, shape index: {}]
  %s3 = inlined_call_operand.vmem [shape: bf16[32,32], index: 3, kind: input, shape index: {}]
  %s4 = inlined_call_operand.vmem [shape: f32[32,1], index: 4, kind: input, shape index: {}]
  %s5 = inlined_call_operand.vmem [shape: bf16[4,32], index: 5, kind: input, shape index: {}]
  %s6 = inlined_call_operand.vmem [shape: f32[4,1], index: 6, kind: input, shape index: {}]
  %s7 = inlined_call_operand.vmem [shape: f32[4,2], index: 7, kind: output, shape index: {}]
  %s8 = sld [smem:[#allocation0]]
  $region38: #{tpu_custom_call.1} parent=0
    _
  %s10 = ssub.s32 1, %s8
  %s11 = scalar_select 0, %s10, %s8
  // Predicated region
  $region2: #{tpu_custom_call.1} parent=0 // pred_check
    _
  $region3: #{tpu_custom_call.1} parent=0 // pred_check_branch
    %13 = sbr.rel (0) target = $region5
  $region4: #{tpu_custom_call.1} parent=0 // pred_region
    _
  $region5: #{tpu_custom_call.1} parent=0 // pred_fallthru
    _
  // Predicated region
  $region6: #{tpu_custom_call.1} parent=0 // pred_check
    _
  $region7: #{tpu_custom_call.1} parent=0 // pred_check_branch
    %15 = sbr.rel (0) target = $region9
  $region8: #{tpu_custom_call.1} parent=0 // pred_region
    _
  $region9: #{tpu_custom_call.1} parent=0 // pred_fallthru
    _
  // Predicated region
  $region10: #{tpu_custom_call.1} parent=0 // pred_check
    _
  $region11: #{tpu_custom_call.1} parent=0 // pred_check_branch
    %17 = sbr.rel (0) target = $region13
  $region12: #{tpu_custom_call.1} parent=0 // pred_region
    _
  $region13: #{tpu_custom_call.1} parent=0 // pred_fallthru
    _
  // Predicated region
  $region14: #{tpu_custom_call.1} parent=0 // pred_check
    _
  $region15: #{tpu_custom_call.1} parent=0 // pred_check_branch
    %19 = sbr.rel (0) target = $region17
  $region16: #{tpu_custom_call.1} parent=0 // pred_region
    _
  $region17: #{tpu_custom_call.1} parent=0 // pred_fallthru
    _
  // Predicated region
  $region18: #{tpu_custom_call.1} parent=0 // pred_check
    _
  $region19: #{tpu_custom_call.1} parent=0 // pred_check_branch
    %21 = sbr.rel (0) target = $region21
  $region20: #{tpu_custom_call.1} parent=0 // pred_region
    _
  $region21: #{tpu_custom_call.1} parent=0 // pred_fallthru
    _
  // Predicated region
  $region22: #{tpu_custom_call.1} parent=0 // pred_check
    _
  $region23: #{tpu_custom_call.1} parent=0 // pred_check_branch
    %23 = sbr.rel (0) target = $region25
  $region24: #{tpu_custom_call.1} parent=0 // pred_region
    _
  $region25: #{tpu_custom_call.1} parent=0 // pred_fallthru
    _
  // Predicated region
  $region26: #{tpu_custom_call.1} parent=0 // pred_check
    _
  $region27: #{tpu_custom_call.1} parent=0 // pred_check_branch
    %25 = sbr.rel (0) target = $region29
  $region28: #{tpu_custom_call.1} parent=0 // pred_region
    _
  $region29: #{tpu_custom_call.1} parent=0 // pred_fallthru
    _
  %v27 = vld [vmem:[%s0] sm:$0xff]
  %v28 = vpack.c.bf16 %v27, %v27
  %v29 = vld [vmem:[%s1] sm:$0xf]
  %v30 = vld [vmem:[%s1 + $0x4] sm:$0xf]
  %v31 = vld [vmem:[%s1 + $0x8] sm:$0xf]
  %v32 = vld [vmem:[%s1 + $0xc] sm:$0xf]
  %v33 = vld [vmem:[%s2] sm:$0xff]
  %v34 = vld [vmem:[%s2 + $0x8] sm:$0xff]
  %v35 = vld [vmem:[%s2 + $0x10] sm:$0xff]
  %v36 = vld [vmem:[%s2 + $0x18] sm:$0xff]
  %38 = vset.pattern.permute.xlu0 0
  %39 = vperm.xlu0 %38, %v33
  %v40 = vpop.permute.xlu0 %39
  %43 = vset.pattern.permute.xlu0 0
  %44 = vperm.xlu0 %43, %v34
  %v45 = vpop.permute.xlu0 %44
  %48 = vset.pattern.permute.xlu0 0
  %49 = vperm.xlu0 %48, %v35
  %v50 = vpop.permute.xlu0 %49
  %53 = vset.pattern.permute.xlu0 0
  %54 = vperm.xlu0 %53, %v36
  %v55 = vpop.permute.xlu0 %54
  %v61 = vunpack.c.l.b16 %v29
  %v62 = vunpack.c.l.b16 %v30
  %v63 = vunpack.c.l.b16 %v31
  %v64 = vunpack.c.l.b16 %v32
  %v65 = vpack.c.b16 %v62, %v61
  %v66 = vpack.c.b16 %v64, %v63
  %vm67 = vcmask 64512
  %v69 = vsel %vm67, %v65, 0
  %v72 = vsel %vm67, %v66, 0
  %vm74 = vcmask 1043456
  %v76 = vsel %vm74, %v28, 0
  %78 = vmatprep.subr.bf16.mxu0 0
  %79 = vmatpush1.bf16.msra.mxu0 %v76
  %80 = vmatprep.subr.bf16.mxu0 0
  %81 = vmatpush1.bf16.msra.mxu0 0
  %82 = vmatprep.subr.bf16.mxu0 0
  %83 = vmatpush1.bf16.msra.mxu0 0
  %84 = vmatprep.subr.bf16.mxu0 0
  %85 = vmatpush1.bf16.msra.mxu0 0
  %86 = vmatprep.subr.bf16.mxu0 0
  %87 = vmatpush1.bf16.msra.mxu0 0
  %88 = vmatprep.subr.bf16.mxu0 0
  %89 = vmatpush1.bf16.msra.mxu0 0
  %90 = vmatprep.subr.bf16.mxu0 0
  %91 = vmatpush1.bf16.msra.mxu0 0
  %92 = vmatprep.subr.bf16.mxu0 0
  %93 = vmatpush1.bf16.msra.mxu0 0
  %94 = vmatprep.subr.bf16.mxu0 0
  %95 = vmatpush1.bf16.msra.mxu0 0
  %96 = vmatprep.subr.bf16.mxu0 0
  %97 = vmatpush1.bf16.msra.mxu0 0
  %98 = vmatprep.subr.bf16.mxu0 0
  %99 = vmatpush1.bf16.msra.mxu0 0
  %100 = vmatprep.subr.bf16.mxu0 0
  %101 = vmatpush1.bf16.msra.mxu0 0
  %102 = vmatprep.subr.bf16.mxu0 0
  %103 = vmatpush1.bf16.msra.mxu0 0
  %104 = vmatprep.subr.bf16.mxu0 0
  %105 = vmatpush1.bf16.msra.mxu0 0
  %106 = vmatprep.subr.bf16.mxu0 0
  %107 = vmatpush1.bf16.msra.mxu0 0
  %108 = vmatprep.subr.bf16.mxu0 0
  %109 = vmatpush1.bf16.msra.mxu0 0
  %110 = vmatprep.mubr.bf16.mxu0 0
  %111 = vmatmul.mubr.bf16.gmra.mrb[0].mxu0 %v69
  %v112 = vpop.f32.mrb[0].mxu0
  %v113 = vadd.f32 %v40, %v112
  %v114 = vpop.f32.mrb[0].mxu0
  %v115 = vpop.f32.mrb[0].mxu0
  %v116 = vadd.f32 %v45, %v115
  %v117 = vpop.f32.mrb[0].mxu0
  %118 = vmatprep.mubr.bf16.mxu0 0
  %119 = vmatmul.mubr.bf16.gmra.mrb[0].mxu0 %v72
  %v120 = vpop.f32.mrb[0].mxu0
  %v121 = vadd.f32 %v50, %v120
  %v122 = vpop.f32.mrb[0].mxu0
  %v123 = vpop.f32.mrb[0].mxu0
  %v124 = vadd.f32 %v55, %v123
  %v125 = vpop.f32.mrb[0].mxu0
  %126 = vdwg.mxu0
  %v127 = vtanh.pop %v113
  %v128 = vtanh.pop %v116
  %v129 = vtanh.pop %v121
  %v130 = vtanh.pop %v124
  %v131 = vld [vmem:[%s3] sm:$0xf]
  %v132 = vld [vmem:[%s3 + $0x4] sm:$0xf]
  %v133 = vld [vmem:[%s3 + $0x8] sm:$0xf]
  %v134 = vld [vmem:[%s3 + $0xc] sm:$0xf]
  %v135 = vpack.c.bf16 %v128, %v127
  %v136 = vpack.c.bf16 %v130, %v129
  %v137 = vld [vmem:[%s4] sm:$0xff]
  %v138 = vld [vmem:[%s4 + $0x8] sm:$0xff]
  %v139 = vld [vmem:[%s4 + $0x10] sm:$0xff]
  %v140 = vld [vmem:[%s4 + $0x18] sm:$0xff]
  %142 = vset.pattern.permute.xlu0 0
  %143 = vperm.xlu0 %142, %v137
  %v144 = vpop.permute.xlu0 %143
  %147 = vset.pattern.permute.xlu0 0
  %148 = vperm.xlu0 %147, %v138
  %v149 = vpop.permute.xlu0 %148
  %152 = vset.pattern.permute.xlu0 0
  %153 = vperm.xlu0 %152, %v139
  %v154 = vpop.permute.xlu0 %153
  %157 = vset.pattern.permute.xlu0 0
  %158 = vperm.xlu0 %157, %v140
  %v159 = vpop.permute.xlu0 %158
  %v165 = vunpack.c.l.b16 %v131
  %v166 = vunpack.c.l.b16 %v132
  %v167 = vunpack.c.l.b16 %v133
  %v168 = vunpack.c.l.b16 %v134
  %v169 = vpack.c.b16 %v166, %v165
  %v170 = vpack.c.b16 %v168, %v167
  %vm171 = vcmask 261120
  %v173 = vsel %vm171, %v169, 0
  %v176 = vsel %vm171, %v170, 0
  %178 = vmatprep.subr.bf16.mxu0 0
  %179 = vmatpush1.bf16.msra.mxu0 %v135
  %180 = vmatprep.subr.bf16.mxu0 0
  %181 = vmatpush1.bf16.msra.mxu0 %v136
  %182 = vmatprep.subr.bf16.mxu0 0
  %183 = vmatpush1.bf16.msra.mxu0 0
  %184 = vmatprep.subr.bf16.mxu0 0
  %185 = vmatpush1.bf16.msra.mxu0 0
  %186 = vmatprep.subr.bf16.mxu0 0
  %187 = vmatpush1.bf16.msra.mxu0 0
  %188 = vmatprep.subr.bf16.mxu0 0
  %189 = vmatpush1.bf16.msra.mxu0 0
  %190 = vmatprep.subr.bf16.mxu0 0
  %191 = vmatpush1.bf16.msra.mxu0 0
  %192 = vmatprep.subr.bf16.mxu0 0
  %193 = vmatpush1.bf16.msra.mxu0 0
  %194 = vmatprep.subr.bf16.mxu0 0
  %195 = vmatpush1.bf16.msra.mxu0 0
  %196 = vmatprep.subr.bf16.mxu0 0
  %197 = vmatpush1.bf16.msra.mxu0 0
  %198 = vmatprep.subr.bf16.mxu0 0
  %199 = vmatpush1.bf16.msra.mxu0 0
  %200 = vmatprep.subr.bf16.mxu0 0
  %201 = vmatpush1.bf16.msra.mxu0 0
  %202 = vmatprep.subr.bf16.mxu0 0
  %203 = vmatpush1.bf16.msra.mxu0 0
  %204 = vmatprep.subr.bf16.mxu0 0
  %205 = vmatpush1.bf16.msra.mxu0 0
  %206 = vmatprep.subr.bf16.mxu0 0
  %207 = vmatpush1.bf16.msra.mxu0 0
  %208 = vmatprep.subr.bf16.mxu0 0
  %209 = vmatpush1.bf16.msra.mxu0 0
  %210 = vmatprep.mubr.bf16.mxu0 0
  %211 = vmatmul.mubr.bf16.gmra.mrb[0].mxu0 %v173
  %v212 = vpop.f32.mrb[0].mxu0
  %v213 = vadd.f32 %v144, %v212
  %v214 = vpop.f32.mrb[0].mxu0
  %v215 = vpop.f32.mrb[0].mxu0
  %v216 = vadd.f32 %v149, %v215
  %v217 = vpop.f32.mrb[0].mxu0
  %218 = vmatprep.mubr.bf16.mxu0 0
  %219 = vmatmul.mubr.bf16.gmra.mrb[0].mxu0 %v176
  %v220 = vpop.f32.mrb[0].mxu0
  %v221 = vadd.f32 %v154, %v220
  %v222 = vpop.f32.mrb[0].mxu0
  %v223 = vpop.f32.mrb[0].mxu0
  %v224 = vadd.f32 %v159, %v223
  %v225 = vpop.f32.mrb[0].mxu0
  %226 = vdwg.mxu0
  %v227 = vtanh.pop %v213
  %v228 = vtanh.pop %v216
  %v229 = vtanh.pop %v221
  %v230 = vtanh.pop %v224
  %v231 = vld [vmem:[%s5] sm:$0x3]
  %v232 = vpack.c.bf16 %v228, %v227
  %v233 = vpack.c.bf16 %v230, %v229
  %v234 = vld [vmem:[%s6] sm:$0xf]
  %236 = vset.pattern.permute.xlu0 0
  %237 = vperm.xlu0 %236, %v234
  %v238 = vpop.permute.xlu0 %237
  %v241 = vsel %vm171, %v231, 0
  %243 = vmatprep.subr.bf16.mxu0 0
  %244 = vmatpush1.bf16.msra.mxu0 %v232
  %245 = vmatprep.subr.bf16.mxu0 0
  %246 = vmatpush1.bf16.msra.mxu0 %v233
  %247 = vmatprep.subr.bf16.mxu0 0
  %248 = vmatpush1.bf16.msra.mxu0 0
  %249 = vmatprep.subr.bf16.mxu0 0
  %250 = vmatpush1.bf16.msra.mxu0 0
  %251 = vmatprep.subr.bf16.mxu0 0
  %252 = vmatpush1.bf16.msra.mxu0 0
  %253 = vmatprep.subr.bf16.mxu0 0
  %254 = vmatpush1.bf16.msra.mxu0 0
  %255 = vmatprep.subr.bf16.mxu0 0
  %256 = vmatpush1.bf16.msra.mxu0 0
  %257 = vmatprep.subr.bf16.mxu0 0
  %258 = vmatpush1.bf16.msra.mxu0 0
  %259 = vmatprep.subr.bf16.mxu0 0
  %260 = vmatpush1.bf16.msra.mxu0 0
  %261 = vmatprep.subr.bf16.mxu0 0
  %262 = vmatpush1.bf16.msra.mxu0 0
  %263 = vmatprep.subr.bf16.mxu0 0
  %264 = vmatpush1.bf16.msra.mxu0 0
  %265 = vmatprep.subr.bf16.mxu0 0
  %266 = vmatpush1.bf16.msra.mxu0 0
  %267 = vmatprep.subr.bf16.mxu0 0
  %268 = vmatpush1.bf16.msra.mxu0 0
  %269 = vmatprep.subr.bf16.mxu0 0
  %270 = vmatpush1.bf16.msra.mxu0 0
  %271 = vmatprep.subr.bf16.mxu0 0
  %272 = vmatpush1.bf16.msra.mxu0 0
  %273 = vmatprep.subr.bf16.mxu0 0
  %274 = vmatpush1.bf16.msra.mxu0 0
  %275 = vmatprep.mubr.bf16.mxu0 0
  %276 = vmatmul.mubr.bf16.gmra.mrb[0].mxu0 %v241
  %v277 = vpop.f32.mrb[0].mxu0
  %v278 = vadd.f32 %v238, %v277
  %v279 = vpop.f32.mrb[0].mxu0
  %v280 = vpop.f32.mrb[0].mxu0
  %v281 = vpop.f32.mrb[0].mxu0
  %282 = vdwg.mxu0
  %vm283 = vcmask 11264
  %v284 = vsel %vm283, %v278, -inf
  %v285 = vrot.slane %v284, 4
  %v286 = vmax.f32 %v284, %v285
  %v287 = vrot.slane %v286, 2
  %v288 = vmax.f32 %v286, %v287
  %v289 = vrot.slane %v288, 1
  %v290 = vmax.f32 %v288, %v289
  %v291 = vsub.f32 %v278, %v290
  %v292 = vmul.f32 %v291, 1.442695
  %v293 = vpow.pop %v292
  %v294 = vsel %vm283, %v293, 0.0
  %v295 = vrot.slane %v294, 4
  %v296 = vadd.f32 %v294, %v295
  %v297 = vrot.slane %v296, 2
  %v298 = vadd.f32 %v296, %v297
  %v299 = vrot.slane %v298, 1
  %v300 = vadd.f32 %v298, %v299
  %v301 = vrcp.pop %v300
  %v302 = vmul.f32 %v293, %v301
  %303 = vst.msk [vmem:[%s7] sm:$0xf] %vm283, %v302
  // Predicated region
  $region30: #{tpu_custom_call.1} parent=0 // pred_check
    _
  $region31: #{tpu_custom_call.1} parent=0 // pred_check_branch
    %305 = sbr.rel (0) target = $region33
  $region32: #{tpu_custom_call.1} parent=0 // pred_region
    _
  $region33: #{tpu_custom_call.1} parent=0 // pred_fallthru
    _
  // Predicated region
  $region34: #{tpu_custom_call.1} parent=0 // pred_check
    _
  $region35: #{tpu_custom_call.1} parent=0 // pred_check_branch
    %307 = sbr.rel (0) target = $region37
  $region36: #{tpu_custom_call.1} parent=0 // pred_region
    _
  $region37: #{tpu_custom_call.1} parent=0 // pred_fallthru
    _

</llo_original>
